<compile_context>
chip_gen: v5e
topology: v5e:2x2
jax: 0.10.0
libtpu: 0.0.40
codegen_flags: <defaults>
</compile_context>

<pallas_src>
import functools
import math

import jax
import jax.numpy as jnp
from jax.experimental import pallas as pl
from jax.experimental.pallas import tpu as pltpu


def _silu(h):
    # Exact SiLU: sigmoid(x) = 0.5 * (1 + tanh(x / 2)).  Single EUP push (tanh);
    # the extra mul/add ride the 4-wide VALU slots which have slack.
    return h * (0.5 * (1.0 + jnp.tanh(0.5 * h)))


def time_embedding_kernel(t_ref, w1_ref, b1_ref, w2_ref, b2_ref, o_ref,
                          *, dim, neg_log_scale):
    half = dim // 2
    Bp = t_ref.shape[0]

    t = t_ref[...]                                                  # [Bp, 1] f32

    # Frequency row computed once as [1, dim]; sin/cos selected by lane mask
    # (no concatenate, no XLU relayout).  EUP exp work is dim elements, not B*dim.
    lane_row = jax.lax.broadcasted_iota(jnp.int32, (1, dim), 1)     # [1, dim]
    k = jnp.where(lane_row < half, lane_row, lane_row - half).astype(jnp.float32)
    freqs = jnp.exp(neg_log_scale * k)                              # [1, dim]
    args = t * freqs                                                # [Bp, dim]
    lane = jax.lax.broadcasted_iota(jnp.int32, (Bp, dim), 1)
    emb = jnp.where(lane < half, jnp.sin(args), jnp.cos(args))      # [Bp, dim] f32

    # lin1 + SiLU over the FULL hidden width (w1/b1 are resident across grid
    # steps; recomputing lin1 per tile is a few hundred MXU cycles and keeps the
    # kernel correct under megacore sharding of the "parallel" grid axis).
    h = jnp.dot(emb.astype(jnp.bfloat16), w1_ref[...],
                preferred_element_type=jnp.float32) + b1_ref[...]
    h = _silu(h)

    # lin2 + SiLU for this tile of output columns.
    h2 = jnp.dot(h.astype(jnp.bfloat16), w2_ref[...],
                 preferred_element_type=jnp.float32) + b2_ref[...]
    o_ref[...] = _silu(h2).astype(o_ref.dtype)


def prepare_params(w1, b1, w2, b2):
    """One-time parameter preparation (bf16 weight cast, [1, hidden] biases).

    Done once at init so the per-call hot path never re-reads / re-casts the
    weights in HBM.
    """
    return dict(
        w1=w1.astype(jnp.bfloat16),
        b1=b1.astype(jnp.float32).reshape(1, -1),
        w2=w2.astype(jnp.bfloat16),
        b2=b2.astype(jnp.float32).reshape(1, -1),
    )


def time_embedding(params, t, dim):
    """params: output of prepare_params; t: [B] timesteps -> [B, 4*dim] f32."""
    B = t.shape[0]
    hidden = dim * 4
    half = dim // 2

    # Pad batch to a multiple of 16 (bf16 sublane packing of the MXU LHS).
    Bp = max(16, ((B + 15) // 16) * 16)
    t2 = jnp.pad(t.astype(jnp.float32), (0, Bp - B)).reshape(Bp, 1)

    # Tile the output hidden axis.  For toy sizes this is one tile; for large
    # dim it bounds the resident bf16 w2 slice (v7x: 64 MiB VMEM total).
    tn = 512 if (hidden > 512 and hidden % 512 == 0) else hidden
    n_tiles = hidden // tn

    neg_log_scale = -math.log(10000.0) / half

    # Advisory cost so XLA can overlap this tiny custom call with neighbours.
    bytes_accessed = (t2.size * 4 + params["w1"].size * 2 + params["w2"].size * 2
                      + params["b1"].size * 4 + params["b2"].size * 4
                      + Bp * hidden * 4)
    cost = pl.CostEstimate(
        flops=2 * Bp * (dim * hidden + hidden * hidden),
        transcendentals=dim + Bp * dim + 2 * Bp * hidden,
        bytes_accessed=bytes_accessed,
    )

    # VMEM budget: double-buffered inputs/outputs + slack, clamped for v7x.
    vmem_est = 2 * (Bp * 4                      # t
                    + dim * hidden * 2          # w1 (bf16, resident)
                    + hidden * 4                # b1
                    + hidden * tn * 2           # w2 tile (bf16)
                    + tn * 4                    # b2 tile
                    + Bp * tn * 4)              # out tile
    vmem_limit = int(min(60 * 1024 * 1024, max(vmem_est + (4 << 20), 8 << 20)))

    out = pl.pallas_call(
        functools.partial(time_embedding_kernel, dim=dim,
                          neg_log_scale=neg_log_scale),
        out_shape=jax.ShapeDtypeStruct((Bp, hidden), jnp.float32),
        grid=(n_tiles,),
        in_specs=[
            pl.BlockSpec((Bp, 1), lambda j: (0, 0)),        # t       (resident)
            pl.BlockSpec((dim, hidden), lambda j: (0, 0)),  # w1      (resident)
            pl.BlockSpec((1, hidden), lambda j: (0, 0)),    # b1      (resident)
            pl.BlockSpec((hidden, tn), lambda j: (0, j)),   # w2 tile
            pl.BlockSpec((1, tn), lambda j: (0, j)),        # b2 tile
        ],
        out_specs=pl.BlockSpec((Bp, tn), lambda j: (0, j)),
        compiler_params=pltpu.CompilerParams(
            dimension_semantics=("parallel",),
            vmem_limit_bytes=vmem_limit,
        ),
        cost_estimate=cost,
    )(t2, params["w1"], params["b1"], params["w2"], params["b2"])

    return out[:B]


def reference(t, w1, b1, w2, b2, dim):
    half = dim // 2
    freqs = jnp.exp(-math.log(10000.0) * jnp.arange(half, dtype=jnp.float32) / half)
    args = t.astype(jnp.float32)[:, None] * freqs[None]
    emb = jnp.concatenate([jnp.sin(args), jnp.cos(args)], axis=-1)
    h = emb @ w1 + b1
    h = h * jax.nn.sigmoid(h)
    h = h @ w2 + b2
    h = h * jax.nn.sigmoid(h)
    return h


if __name__ == "__main__":
    B = 8
    dim = 32            # -> hidden = 128 (lane-aligned)
    hidden = dim * 4

    key = jax.random.PRNGKey(0)
    k_t, k_w1, k_b1, k_w2, k_b2 = jax.random.split(key, 5)

    # Deterministic synthetic parameters (torch Linear weights are [out, in];
    # stored here directly as [in, out] for the kernel).
    t = jax.random.uniform(k_t, (B,), jnp.float32, 0.0, 1000.0)
    w1 = jax.random.normal(k_w1, (dim, hidden), jnp.float32) * (1.0 / math.sqrt(dim))
    b1 = jax.random.normal(k_b1, (hidden,), jnp.float32) * 0.01
    w2 = jax.random.normal(k_w2, (hidden, hidden), jnp.float32) * (1.0 / math.sqrt(hidden))
    b2 = jax.random.normal(k_b2, (hidden,), jnp.float32) * 0.01

    # One-time param prep (bf16 weight cast, bias reshape) hoisted out of the
    # per-call hot path; the call itself is jitted.
    params = prepare_params(w1, b1, w2, b2)
    apply_fn = jax.jit(functools.partial(time_embedding, dim=dim))

    out = apply_fn(params, t)
    out = jax.block_until_ready(out)

    ref = reference(t, w1, b1, w2, b2, dim)
    assert out.shape == (B, hidden)
    # bf16 MXU operands (f32 accumulate) -> compare with bf16-level tolerance.
    assert jnp.allclose(out, ref, atol=5e-2, rtol=5e-2), "mismatch vs reference"

    print("KERNEL_OK")
</pallas_src>

<mosaic_0001>
module attributes {stable_mosaic.version = 11 : i64} {
  func.func @time_embedding_kernel(%arg0: i32, %arg1: memref<16x1xf32, #tpu.memory_space<vmem>>, %arg2: memref<32x128xbf16, #tpu.memory_space<vmem>>, %arg3: memref<1x128xf32, #tpu.memory_space<vmem>>, %arg4: memref<128x128xbf16, #tpu.memory_space<vmem>>, %arg5: memref<1x128xf32, #tpu.memory_space<vmem>>, %arg6: memref<16x128xf32, #tpu.memory_space<vmem>>) attributes {dimension_semantics = [#tpu.dimension_semantics<parallel>], iteration_bounds = array<i64: 1>, scalar_prefetch = 0 : i64, scratch_operands = 0 : i64, tpu.core_type = #tpu.core_type<tc>, window_params = [{pipeline_mode = #tpu.pipeline_mode<synchronous>, transform_indices = @transform_0, window_bounds = array<i64: 16, 1>}, {pipeline_mode = #tpu.pipeline_mode<synchronous>, transform_indices = @transform_1, window_bounds = array<i64: 32, 128>}, {pipeline_mode = #tpu.pipeline_mode<synchronous>, transform_indices = @transform_2, window_bounds = array<i64: 1, 128>}, {transform_indices = @transform_3, window_bounds = array<i64: 128, 128>}, {transform_indices = @transform_4, window_bounds = array<i64: 1, 128>}, {transform_indices = @transform_5, window_bounds = array<i64: 16, 128>}]} {
    %c0 = arith.constant 0 : index
    %c0_0 = arith.constant 0 : index
    %0 = vector.load %arg1[%c0, %c0_0] : memref<16x1xf32, #tpu.memory_space<vmem>>, vector<16x1xf32>
    %1 = tpu.iota {dimensions = array<i32: 1>} : vector<1x32xi32>
    %c16_i32 = arith.constant 16 : i32
    %2 = vector.broadcast %c16_i32 : i32 to vector<1x32xi32>
    %3 = arith.cmpi slt, %1, %2 : vector<1x32xi32>
    %c16_i32_1 = arith.constant 16 : i32
    %4 = vector.broadcast %c16_i32_1 : i32 to vector<1x32xi32>
    %5 = arith.subi %1, %4 : vector<1x32xi32>
    %6 = arith.select %3, %1, %5 : vector<1x32xi1>, vector<1x32xi32>
    %7 = arith.sitofp %6 : vector<1x32xi32> to vector<1x32xf32>
    %cst = arith.constant -0.575646281 : f32
    %8 = vector.broadcast %cst : f32 to vector<1x32xf32>
    %9 = arith.mulf %8, %7 : vector<1x32xf32>
    %10 = math.exp %9 : vector<1x32xf32>
    %11 = vector.broadcast %0 : vector<16x1xf32> to vector<16x32xf32>
    %12 = vector.broadcast %10 : vector<1x32xf32> to vector<16x32xf32>
    %13 = arith.mulf %11, %12 : vector<16x32xf32>
    %14 = tpu.iota {dimensions = array<i32: 1>} : vector<16x32xi32>
    %c16_i32_2 = arith.constant 16 : i32
    %15 = vector.broadcast %c16_i32_2 : i32 to vector<16x32xi32>
    %16 = arith.cmpi slt, %14, %15 : vector<16x32xi32>
    %17 = math.sin %13 : vector<16x32xf32>
    %18 = math.cos %13 : vector<16x32xf32>
    %19 = arith.select %16, %17, %18 : vector<16x32xi1>, vector<16x32xf32>
    %20 = arith.truncf %19 : vector<16x32xf32> to vector<16x32xbf16>
    %c0_3 = arith.constant 0 : index
    %c0_4 = arith.constant 0 : index
    %21 = vector.load %arg2[%c0_3, %c0_4] : memref<32x128xbf16, #tpu.memory_space<vmem>>, vector<32x128xbf16>
    %cst_5 = arith.constant dense<0.000000e+00> : vector<16x128xf32>
    %22 = tpu.matmul %20, %21, %cst_5 {dimension_numbers = #tpu.dot_dimension_numbers<[1], [0], [0], [1], [0, 0, 1, 1], [], []>} : vector<16x32xbf16>, vector<32x128xbf16>, vector<16x128xf32> -> vector<16x128xf32>
    %c0_6 = arith.constant 0 : index
    %c0_7 = arith.constant 0 : index
    %23 = vector.load %arg3[%c0_6, %c0_7] : memref<1x128xf32, #tpu.memory_space<vmem>>, vector<1x128xf32>
    %24 = vector.broadcast %23 : vector<1x128xf32> to vector<16x128xf32>
    %25 = arith.addf %22, %24 : vector<16x128xf32>
    %cst_8 = arith.constant 5.000000e-01 : f32
    %26 = vector.broadcast %cst_8 : f32 to vector<16x128xf32>
    %27 = arith.mulf %26, %25 : vector<16x128xf32>
    %28 = math.tanh %27 : vector<16x128xf32>
    %cst_9 = arith.constant 1.000000e+00 : f32
    %29 = vector.broadcast %cst_9 : f32 to vector<16x128xf32>
    %30 = arith.addf %29, %28 : vector<16x128xf32>
    %cst_10 = arith.constant 5.000000e-01 : f32
    %31 = vector.broadcast %cst_10 : f32 to vector<16x128xf32>
    %32 = arith.mulf %31, %30 : vector<16x128xf32>
    %33 = arith.mulf %25, %32 : vector<16x128xf32>
    %34 = arith.truncf %33 : vector<16x128xf32> to vector<16x128xbf16>
    %c0_11 = arith.constant 0 : index
    %c0_12 = arith.constant 0 : index
    %35 = vector.load %arg4[%c0_11, %c0_12] : memref<128x128xbf16, #tpu.memory_space<vmem>>, vector<128x128xbf16>
    %cst_13 = arith.constant dense<0.000000e+00> : vector<16x128xf32>
    %36 = tpu.matmul %34, %35, %cst_13 {dimension_numbers = #tpu.dot_dimension_numbers<[1], [0], [0], [1], [0, 0, 1, 1], [], []>} : vector<16x128xbf16>, vector<128x128xbf16>, vector<16x128xf32> -> vector<16x128xf32>
    %c0_14 = arith.constant 0 : index
    %c0_15 = arith.constant 0 : index
    %37 = vector.load %arg5[%c0_14, %c0_15] : memref<1x128xf32, #tpu.memory_space<vmem>>, vector<1x128xf32>
    %38 = vector.broadcast %37 : vector<1x128xf32> to vector<16x128xf32>
    %39 = arith.addf %36, %38 : vector<16x128xf32>
    %cst_16 = arith.constant 5.000000e-01 : f32
    %40 = vector.broadcast %cst_16 : f32 to vector<16x128xf32>
    %41 = arith.mulf %40, %39 : vector<16x128xf32>
    %42 = math.tanh %41 : vector<16x128xf32>
    %cst_17 = arith.constant 1.000000e+00 : f32
    %43 = vector.broadcast %cst_17 : f32 to vector<16x128xf32>
    %44 = arith.addf %43, %42 : vector<16x128xf32>
    %cst_18 = arith.constant 5.000000e-01 : f32
    %45 = vector.broadcast %cst_18 : f32 to vector<16x128xf32>
    %46 = arith.mulf %45, %44 : vector<16x128xf32>
    %47 = arith.mulf %39, %46 : vector<16x128xf32>
    %c0_19 = arith.constant 0 : index
    %c0_20 = arith.constant 0 : index
    %48 = vector.load %arg6[%c0_19, %c0_20] : memref<16x128xf32, #tpu.memory_space<vmem>>, vector<16x128xf32>
    tpu.vector_store %arg6[%c0_19, %c0_20], %47 {strides = array<i32>} : memref<16x128xf32, #tpu.memory_space<vmem>>, vector<16x128xf32>,
    return
  }
  func.func @transform_0(%arg0: i32) -> (i32, i32) {
    %c0_i32 = arith.constant 0 : i32
    %c0_i32_0 = arith.constant 0 : i32
    %c0_i32_1 = arith.constant 0 : i32
    return %c0_i32, %c0_i32_0 : i32, i32
  }
  func.func @transform_1(%arg0: i32) -> (i32, i32) {
    %c0_i32 = arith.constant 0 : i32
    %c0_i32_0 = arith.constant 0 : i32
    %c0_i32_1 = arith.constant 0 : i32
    return %c0_i32, %c0_i32_0 : i32, i32
  }
  func.func @transform_2(%arg0: i32) -> (i32, i32) {
    %c0_i32 = arith.constant 0 : i32
    %c0_i32_0 = arith.constant 0 : i32
    %c0_i32_1 = arith.constant 0 : i32
    return %c0_i32, %c0_i32_0 : i32, i32
  }
  func.func @transform_3(%arg0: i32) -> (i32, i32) {
    %c0_i32 = arith.constant 0 : i32
    %c0_i32_0 = arith.constant 0 : i32
    return %c0_i32, %arg0 : i32, i32
  }
  func.func @transform_4(%arg0: i32) -> (i32, i32) {
    %c0_i32 = arith.constant 0 : i32
    %c0_i32_0 = arith.constant 0 : i32
    return %c0_i32, %arg0 : i32, i32
  }
  func.func @transform_5(%arg0: i32) -> (i32, i32) {
    %c0_i32 = arith.constant 0 : i32
    %c0_i32_0 = arith.constant 0 : i32
    return %c0_i32, %arg0 : i32, i32
  }
}

</mosaic_0001>

<llo_original>
// kernel: time_embedding.1
$region0: #{time_embedding.1}
  #allocation0 [shape = 'u32[]', space=smem, size = 0x4, offset = 0x4, fixed_abs, tag = 'smem constant byte address 0x4 - core index']
  #allocation1 [shape = 'u32[72,128]{1,0:T(1,128)}', space=vmem, size = 0x9000, scoped, tag = 'internal scratch']
  %s0 = inlined_call_operand.vmem [shape: f32[16,1], index: 0, kind: input, shape index: {}]
  %s1 = inlined_call_operand.vmem [shape: bf16[32,128], index: 1, kind: input, shape index: {}]
  %s2 = inlined_call_operand.vmem [shape: f32[1,128], index: 2, kind: input, shape index: {}]
  %s3 = inlined_call_operand.hbm [shape: bf16[128,128], index: 3, kind: input, shape index: {}]
  %s4 = inlined_call_operand.vmem [shape: f32[1,128], index: 4, kind: input, shape index: {}]
  %s5 = inlined_call_operand.vmem [shape: f32[16,128], index: 5, kind: output, shape index: {}]
  %s6 = sld [smem:[#allocation0]]
  $region34: #{time_embedding.1} parent=0
    _
  %s8 = ssub.s32 1, %s6
  %s9 = scalar_select 0, %s8, %s6
  $region1: #{time_embedding.1} parent=0
    #allocation2 [shape = 'u8[32768]{0}', space=vmem, size = 0x8000, scoped, tag = 'input window, operand 3, single buffered']
    #allocation3 [shape = 's32[1]{0}', space=sflag, size = 0x4, scoped, tag = 'scoped memory for time_embedding.1']
    %10 = vsyncpa [#allocation3], 0
    // Predicated region
    $region2: #{time_embedding.1} parent=1 // pred_check
      _
    $region3: #{time_embedding.1} parent=1 // pred_check_branch
      %12 = sbr.rel (0) target = $region5
    $region4: #{time_embedding.1} parent=1 // pred_region
      _
    $region5: #{time_embedding.1} parent=1 // pred_fallthru
      _
    // Predicated region
    $region6: #{time_embedding.1} parent=1 // pred_check
      _
    $region7: #{time_embedding.1} parent=1 // pred_check_branch
      %14 = sbr.rel (0) target = $region9
    $region8: #{time_embedding.1} parent=1 // pred_region
      _
    $region9: #{time_embedding.1} parent=1 // pred_fallthru
      _
    // Predicated region
    $region10: #{time_embedding.1} parent=1 // pred_check
      _
    $region11: #{time_embedding.1} parent=1 // pred_check_branch
      %16 = sbr.rel (0) target = $region13
    $region12: #{time_embedding.1} parent=1 // pred_region
      _
    $region13: #{time_embedding.1} parent=1 // pred_fallthru
      _
    // Predicated region
    $region14: #{time_embedding.1} parent=1 // pred_check
      _
    $region15: #{time_embedding.1} parent=1 // pred_check_branch
      %18 = sbr.rel (0) target = $region17
    $region16: #{time_embedding.1} parent=1 // pred_region
      %20 = vsyncadd [#allocation3], 0
      %s21 = sshll.u32 %s3, 4
      %s22 = int_to_ptr.hbm [resolvable:$true] %s21
      %s23 = sshll.u32 [#allocation2], 4
      %s24 = int_to_ptr.vmem [resolvable:$true] %s23
      %29 = dma.hbm_to_vmem [thread:$0]  %s22, 1024, %s24, [#allocation3], 64, 64, 4
    $region17: #{time_embedding.1} parent=1 // pred_fallthru
      _
    // Predicated region
    $region18: #{time_embedding.1} parent=1 // pred_check
      _
    $region19: #{time_embedding.1} parent=1 // pred_check_branch
      %31 = sbr.rel (0) target = $region21
    $region20: #{time_embedding.1} parent=1 // pred_region
      _
    $region21: #{time_embedding.1} parent=1 // pred_fallthru
      _
    // Predicated region
    $region22: #{time_embedding.1} parent=1 // pred_check
      _
    $region23: #{time_embedding.1} parent=1 // pred_check_branch
      %33 = sbr.rel (0) target = $region25
    $region24: #{time_embedding.1} parent=1 // pred_region
      %35 = dma.done [#allocation3], 1024
    $region25: #{time_embedding.1} parent=1 // pred_fallthru
      _
    %v37 = vld [vmem:[%s0] sm:$0xff]
    %v38 = vld [vmem:[%s0 + $0x8] sm:$0xff]
    %v39 = vlaneseq
    %v40 = vand.u32 %v39, 127
    %vm41 = vcmp.lt.s32.totalorder %v40, 16
    %v42 = vsub.s32 %v40, 16
    %v43 = vsel %vm41, %v40, %v42
    %v44 = vcvt.s32.f32 %v43
    %v45 = vmul.f32 %v44, -0.5756463
    %v46 = vmul.f32 %v45, 1.442695
    %v47 = vpow.pop %v46
    %49 = vset.pattern.permute.xlu0 0
    %50 = vperm.xlu0 %49, %v37
    %v51 = vpop.permute.xlu0 %50
    %54 = vset.pattern.permute.xlu0 0
    %55 = vperm.xlu0 %54, %v38
    %v56 = vpop.permute.xlu0 %55
    %v58 = vmul.f32 %v51, %v47
    %v59 = vmul.f32 %v56, %v47
    %v60 = vand.u32 2147483647, %v58
    %vm61 = vcmp.le.f32.partialorder %v60, 0.7853982
    %vm62 = vcmp.lt.s32.totalorder %v58, 0
    %v63 = vand.u32 %v58, 2139095040
    %v64 = vshrl.u32 %v63, 23
    %v65 = vsub.s32 %v64, 127
    %v66 = vand.u32 2147483647, %v58
    %v67 = vand.u32 %v66, 8388607
    %v68 = vor.u32 %v67, 8388608
    %v69 = vsub.s32 0, %v68
    %v70 = vadd.s32 %v65, 1
    %vm71 = vcmp.gt.s32.totalorder %v70, 0
    %v72 = vsel %vm71, %v70, 0
    %v73 = vshrl.u32 %v72, 5
    %v74 = vand.u32 %v72, 31
    %v75 = vsub.s32 32, %v74
    %v76 = vshrl.u32 683565275, %v75
    %v77 = vshll.u32 683565275, %v74
    %v78 = vshrl.u32 2475754826, %v75
    %v79 = vor.u32 %v77, %v78
    %v80 = vshll.u32 2475754826, %v74
    %v81 = vshrl.u32 2131351028, %v75
    %v82 = vor.u32 %v80, %v81
    %v83 = vshll.u32 2131351028, %v74
    %v84 = vshrl.u32 2102212464, %v75
    %v85 = vor.u32 %v83, %v84
    %v86 = vshll.u32 2102212464, %v74
    %v87 = vshrl.u32 920167782, %v75
    %v88 = vor.u32 %v86, %v87
    %v89 = vshll.u32 920167782, %v74
    %v90 = vshrl.u32 1326507024, %v75
    %v91 = vor.u32 %v89, %v90
    %vm92 = vcmp.lt.s32.totalorder %v73, 1
    %vm93 = vcmp.lt.s32.totalorder %v73, 2
    %vm94 = vcmp.lt.s32.totalorder %v73, 3
    %vm95 = vcmp.lt.s32.totalorder %v73, 4
    %v96 = vsel %vm92, %v76, %v79
    %v97 = vsel %vm95, %v85, 2102212464
    %v98 = vsel %vm94, %v82, %v97
    %v99 = vsel %vm93, %v96, %v98
    %v100 = vsel %vm92, %v79, %v82
    %v101 = vsel %vm95, %v88, 920167782
    %v102 = vsel %vm94, %v85, %v101
    %v103 = vsel %vm93, %v100, %v102
    %v104 = vsel %vm92, %v82, %v85
    %v105 = vsel %vm95, %v91, 1326507024
    %v106 = vsel %vm94, %v88, %v105
    %v107 = vsel %vm93, %v104, %v106
    %v108 = vshll.u32 %v68, 8
    %v109 = vand.u32 %v108, 65535
    %v110 = vshrl.u32 %v108, 16
    %v111 = vand.u32 %v107, 65535
    %v112 = vshrl.u32 %v107, 16
    %v113 = vmul.u32 %v109, %v111
    %v114 = vmul.u32 %v109, %v112
    %v115 = vmul.u32 %v110, %v111
    %v116 = vmul.u32 %v110, %v112
    %v117 = vshll.u32 %v114, 16
    %v118 = vshrl.u32 %v114, 16
    %v119 = vshll.u32 %v115, 16
    %v120 = vshrl.u32 %v115, 16
    %vm121 = vc.u32 %v113, %v117
    %v122 = vsel %vm121, 1, 0
    %v123 = vadd.s32 %v113, %v117
    %v124 = vadd.s32 %v116, %v122
    %vm125 = vc.u32 %v123, %v119
    %v126 = vsel %vm125, 1, 0
    %v127 = vadd.s32 %v123, %v119
    %v128 = vadd.s32 %v124, %v126
    %v129 = vadd.s32 %v128, %v118
    %v130 = vadd.s32 %v129, %v120
    %v131 = vand.u32 %v108, 65535
    %v132 = vshrl.u32 %v108, 16
    %v133 = vand.u32 %v103, 65535
    %v134 = vshrl.u32 %v103, 16
    %v135 = vmul.u32 %v131, %v133
    %v136 = vmul.u32 %v131, %v134
    %v137 = vmul.u32 %v132, %v133
    %v138 = vmul.u32 %v132, %v134
    %v139 = vshll.u32 %v136, 16
    %v140 = vshrl.u32 %v136, 16
    %v141 = vshll.u32 %v137, 16
    %v142 = vshrl.u32 %v137, 16
    %vm143 = vc.u32 %v135, %v139
    %v144 = vsel %vm143, 1, 0
    %v145 = vadd.s32 %v135, %v139
    %v146 = vadd.s32 %v138, %v144
    %vm147 = vc.u32 %v145, %v141
    %v148 = vsel %vm147, 1, 0
    %v149 = vadd.s32 %v145, %v141
    %v150 = vadd.s32 %v146, %v148
    %v151 = vadd.s32 %v150, %v140
    %v152 = vadd.s32 %v151, %v142
    %v153 = vmul.u32 %v108, %v99
    %v154 = vadd.s32 %v130, %v149
    %vm155 = vc.u32 %v130, %v149
    %v156 = vadd.s32 %v152, 1
    %v157 = vsel %vm155, %v156, %v152
    %v158 = vadd.s32 %v153, %v157
    %v159 = vadd.s32 %v158, 536870912
    %v160 = vshrl.u32 %v159, 30
    %v161 = vshll.u32 %v160, 30
    %v162 = vsub.s32 %v158, %v161
    %vm163 = vcmp.lt.s32.totalorder %v162, 0
    %v164 = vsub.s32 0, %v162
    %v165 = vsel %vm163, %v164, %v162
    %v166 = vclz %v165
    %v167 = vsub.s32 %v166, 2
    %vm168 = vcmp.gt.s32.totalorder 0, %v167
    %v169 = vsel %vm168, 0, %v167
    %v170 = vsub.s32 32, %v169
    %v171 = vshll.u32 %v162, %v169
    %v172 = vshrl.u32 %v154, %v170
    %v173 = vor.u32 %v171, %v172
    %v174 = vsub.s32 4294967266, %v169
    %v175 = vadd.s32 %v174, 127
    %v176 = vshll.u32 %v175, 23
    %v177 = vor.u32 4788187, %v176
    %v178 = vand.u32 2147483647, %v177
    %v180 = vcvt.s32.f32 %v173
    %v181 = vmul.f32 %v180, %v178
    %v182 = vxor.u32 %v181, 2147483648
    %v183 = vsel %vm62, %v182, %v181
    %v184 = vsub.s32 4, %v160
    %v185 = vsel %vm62, %v184, %v160
    %v186 = vsel %vm61, %v58, %v183
    %v187 = vsel %vm61, 0, %v185
    %v188 = vmul.f32 %v186, %v186
    %v189 = vmul.f32 %v188, -0.001358992
    %v190 = vadd.f32 %v189, 0.041655596
    %v191 = vmul.f32 %v188, %v190
    %v192 = vadd.f32 %v191, -0.4999988
    %v193 = vmul.f32 %v188, %v192
    %v194 = vadd.f32 1.0, %v193
    %v195 = vmul.f32 %v186, %v186
    %v196 = vmul.f32 %v195, -0.00019511016
    %v197 = vadd.f32 %v196, 0.008332121
    %v198 = vmul.f32 %v195, %v197
    %v199 = vadd.f32 %v198, -0.16666654
    %v200 = vmul.f32 %v195, %v199
    %v201 = vadd.f32 %v200, 1.0
    %v202 = vmul.f32 %v201, %v186
    %vm203 = vweird.f32 %v58
    %v204 = vadd.s32 %v187, 3
    %v205 = vand.u32 %v204, 3
    %vm206 = vcmp.lt.s32.totalorder %v205, 2
    %vm207 = vcmp.eq.s32.totalorder %v205, 0
    %v208 = vxor.u32 %v202, 2147483648
    %v209 = vsel %vm207, %v194, %v208
    %vm210 = vcmp.eq.s32.totalorder %v205, 2
    %v211 = vxor.u32 %v194, 2147483648
    %v212 = vsel %vm210, %v211, %v202
    %v213 = vsel %vm206, %v209, %v212
    %v214 = vsel %vm203, nan, %v213
    %v215 = vand.u32 2147483647, %v59
    %vm216 = vcmp.le.f32.partialorder %v215, 0.7853982
    %vm217 = vcmp.lt.s32.totalorder %v59, 0
    %v218 = vand.u32 %v59, 2139095040
    %v219 = vshrl.u32 %v218, 23
    %v220 = vsub.s32 %v219, 127
    %v221 = vand.u32 2147483647, %v59
    %v222 = vand.u32 %v221, 8388607
    %v223 = vor.u32 %v222, 8388608
    %v224 = vsub.s32 0, %v223
    %v225 = vadd.s32 %v220, 1
    %vm226 = vcmp.gt.s32.totalorder %v225, 0
    %v227 = vsel %vm226, %v225, 0
    %v228 = vshrl.u32 %v227, 5
    %v229 = vand.u32 %v227, 31
    %v230 = vsub.s32 32, %v229
    %v231 = vshrl.u32 683565275, %v230
    %v232 = vshll.u32 683565275, %v229
    %v233 = vshrl.u32 2475754826, %v230
    %v234 = vor.u32 %v232, %v233
    %v235 = vshll.u32 2475754826, %v229
    %v236 = vshrl.u32 2131351028, %v230
    %v237 = vor.u32 %v235, %v236
    %v238 = vshll.u32 2131351028, %v229
    %v239 = vshrl.u32 2102212464, %v230
    %v240 = vor.u32 %v238, %v239
    %v241 = vshll.u32 2102212464, %v229
    %v242 = vshrl.u32 920167782, %v230
    %v243 = vor.u32 %v241, %v242
    %v244 = vshll.u32 920167782, %v229
    %v245 = vshrl.u32 1326507024, %v230
    %v246 = vor.u32 %v244, %v245
    %vm247 = vcmp.lt.s32.totalorder %v228, 1
    %vm248 = vcmp.lt.s32.totalorder %v228, 2
    %vm249 = vcmp.lt.s32.totalorder %v228, 3
    %vm250 = vcmp.lt.s32.totalorder %v228, 4
    %v251 = vsel %vm247, %v231, %v234
    %v252 = vsel %vm250, %v240, 2102212464
    %v253 = vsel %vm249, %v237, %v252
    %v254 = vsel %vm248, %v251, %v253
    %v255 = vsel %vm247, %v234, %v237
    %v256 = vsel %vm250, %v243, 920167782
    %v257 = vsel %vm249, %v240, %v256
    %v258 = vsel %vm248, %v255, %v257
    %v259 = vsel %vm247, %v237, %v240
    %v260 = vsel %vm250, %v246, 1326507024
    %v261 = vsel %vm249, %v243, %v260
    %v262 = vsel %vm248, %v259, %v261
    %v263 = vshll.u32 %v223, 8
    %v264 = vand.u32 %v263, 65535
    %v265 = vshrl.u32 %v263, 16
    %v266 = vand.u32 %v262, 65535
    %v267 = vshrl.u32 %v262, 16
    %v268 = vmul.u32 %v264, %v266
    %v269 = vmul.u32 %v264, %v267
    %v270 = vmul.u32 %v265, %v266
    %v271 = vmul.u32 %v265, %v267
    %v272 = vshll.u32 %v269, 16
    %v273 = vshrl.u32 %v269, 16
    %v274 = vshll.u32 %v270, 16
    %v275 = vshrl.u32 %v270, 16
    %vm276 = vc.u32 %v268, %v272
    %v277 = vsel %vm276, 1, 0
    %v278 = vadd.s32 %v268, %v272
    %v279 = vadd.s32 %v271, %v277
    %vm280 = vc.u32 %v278, %v274
    %v281 = vsel %vm280, 1, 0
    %v282 = vadd.s32 %v278, %v274
    %v283 = vadd.s32 %v279, %v281
    %v284 = vadd.s32 %v283, %v273
    %v285 = vadd.s32 %v284, %v275
    %v286 = vand.u32 %v263, 65535
    %v287 = vshrl.u32 %v263, 16
    %v288 = vand.u32 %v258, 65535
    %v289 = vshrl.u32 %v258, 16
    %v290 = vmul.u32 %v286, %v288
    %v291 = vmul.u32 %v286, %v289
    %v292 = vmul.u32 %v287, %v288
    %v293 = vmul.u32 %v287, %v289
    %v294 = vshll.u32 %v291, 16
    %v295 = vshrl.u32 %v291, 16
    %v296 = vshll.u32 %v292, 16
    %v297 = vshrl.u32 %v292, 16
    %vm298 = vc.u32 %v290, %v294
    %v299 = vsel %vm298, 1, 0
    %v300 = vadd.s32 %v290, %v294
    %v301 = vadd.s32 %v293, %v299
    %vm302 = vc.u32 %v300, %v296
    %v303 = vsel %vm302, 1, 0
    %v304 = vadd.s32 %v300, %v296
    %v305 = vadd.s32 %v301, %v303
    %v306 = vadd.s32 %v305, %v295
    %v307 = vadd.s32 %v306, %v297
    %v308 = vmul.u32 %v263, %v254
    %v309 = vadd.s32 %v285, %v304
    %vm310 = vc.u32 %v285, %v304
    %v311 = vadd.s32 %v307, 1
    %v312 = vsel %vm310, %v311, %v307
    %v313 = vadd.s32 %v308, %v312
    %v314 = vadd.s32 %v313, 536870912
    %v315 = vshrl.u32 %v314, 30
    %v316 = vshll.u32 %v315, 30
    %v317 = vsub.s32 %v313, %v316
    %vm318 = vcmp.lt.s32.totalorder %v317, 0
    %v319 = vsub.s32 0, %v317
    %v320 = vsel %vm318, %v319, %v317
    %v321 = vclz %v320
    %v322 = vsub.s32 %v321, 2
    %vm323 = vcmp.gt.s32.totalorder 0, %v322
    %v324 = vsel %vm323, 0, %v322
    %v325 = vsub.s32 32, %v324
    %v326 = vshll.u32 %v317, %v324
    %v327 = vshrl.u32 %v309, %v325
    %v328 = vor.u32 %v326, %v327
    %v329 = vsub.s32 4294967266, %v324
    %v330 = vadd.s32 %v329, 127
    %v331 = vshll.u32 %v330, 23
    %v332 = vor.u32 4788187, %v331
    %v333 = vand.u32 2147483647, %v332
    %v335 = vcvt.s32.f32 %v328
    %v336 = vmul.f32 %v335, %v333
    %v337 = vxor.u32 %v336, 2147483648
    %v338 = vsel %vm217, %v337, %v336
    %v339 = vsub.s32 4, %v315
    %v340 = vsel %vm217, %v339, %v315
    %v341 = vsel %vm216, %v59, %v338
    %v342 = vsel %vm216, 0, %v340
    %v343 = vmul.f32 %v341, %v341
    %v344 = vmul.f32 %v343, -0.001358992
    %v345 = vadd.f32 %v344, 0.041655596
    %v346 = vmul.f32 %v343, %v345
    %v347 = vadd.f32 %v346, -0.4999988
    %v348 = vmul.f32 %v343, %v347
    %v349 = vadd.f32 1.0, %v348
    %v350 = vmul.f32 %v341, %v341
    %v351 = vmul.f32 %v350, -0.00019511016
    %v352 = vadd.f32 %v351, 0.008332121
    %v353 = vmul.f32 %v350, %v352
    %v354 = vadd.f32 %v353, -0.16666654
    %v355 = vmul.f32 %v350, %v354
    %v356 = vadd.f32 %v355, 1.0
    %v357 = vmul.f32 %v356, %v341
    %vm358 = vweird.f32 %v59
    %v359 = vadd.s32 %v342, 3
    %v360 = vand.u32 %v359, 3
    %vm361 = vcmp.lt.s32.totalorder %v360, 2
    %vm362 = vcmp.eq.s32.totalorder %v360, 0
    %v363 = vxor.u32 %v357, 2147483648
    %v364 = vsel %vm362, %v349, %v363
    %vm365 = vcmp.eq.s32.totalorder %v360, 2
    %v366 = vxor.u32 %v349, 2147483648
    %v367 = vsel %vm365, %v366, %v357
    %v368 = vsel %vm361, %v364, %v367
    %v369 = vsel %vm358, nan, %v368
    %v370 = vand.u32 2147483647, %v58
    %vm371 = vcmp.le.f32.partialorder %v370, 0.7853982
    %vm372 = vcmp.lt.s32.totalorder %v58, 0
    %v373 = vand.u32 %v58, 2139095040
    %v374 = vshrl.u32 %v373, 23
    %v375 = vsub.s32 %v374, 127
    %v376 = vand.u32 2147483647, %v58
    %v377 = vand.u32 %v376, 8388607
    %v378 = vor.u32 %v377, 8388608
    %v379 = vsub.s32 0, %v378
    %v380 = vadd.s32 %v375, 1
    %vm381 = vcmp.gt.s32.totalorder %v380, 0
    %v382 = vsel %vm381, %v380, 0
    %v383 = vshrl.u32 %v382, 5
    %v384 = vand.u32 %v382, 31
    %v385 = vsub.s32 32, %v384
    %v386 = vshrl.u32 683565275, %v385
    %v387 = vshll.u32 683565275, %v384
    %v388 = vshrl.u32 2475754826, %v385
    %v389 = vor.u32 %v387, %v388
    %v390 = vshll.u32 2475754826, %v384
    %v391 = vshrl.u32 2131351028, %v385
    %v392 = vor.u32 %v390, %v391
    %v393 = vshll.u32 2131351028, %v384
    %v394 = vshrl.u32 2102212464, %v385
    %v395 = vor.u32 %v393, %v394
    %v396 = vshll.u32 2102212464, %v384
    %v397 = vshrl.u32 920167782, %v385
    %v398 = vor.u32 %v396, %v397
    %v399 = vshll.u32 920167782, %v384
    %v400 = vshrl.u32 1326507024, %v385
    %v401 = vor.u32 %v399, %v400
    %vm402 = vcmp.lt.s32.totalorder %v383, 1
    %vm403 = vcmp.lt.s32.totalorder %v383, 2
    %vm404 = vcmp.lt.s32.totalorder %v383, 3
    %vm405 = vcmp.lt.s32.totalorder %v383, 4
    %v406 = vsel %vm402, %v386, %v389
    %v407 = vsel %vm405, %v395, 2102212464
    %v408 = vsel %vm404, %v392, %v407
    %v409 = vsel %vm403, %v406, %v408
    %v410 = vsel %vm402, %v389, %v392
    %v411 = vsel %vm405, %v398, 920167782
    %v412 = vsel %vm404, %v395, %v411
    %v413 = vsel %vm403, %v410, %v412
    %v414 = vsel %vm402, %v392, %v395
    %v415 = vsel %vm405, %v401, 1326507024
    %v416 = vsel %vm404, %v398, %v415
    %v417 = vsel %vm403, %v414, %v416
    %v418 = vshll.u32 %v378, 8
    %v419 = vand.u32 %v418, 65535
    %v420 = vshrl.u32 %v418, 16
    %v421 = vand.u32 %v417, 65535
    %v422 = vshrl.u32 %v417, 16
    %v423 = vmul.u32 %v419, %v421
    %v424 = vmul.u32 %v419, %v422
    %v425 = vmul.u32 %v420, %v421
    %v426 = vmul.u32 %v420, %v422
    %v427 = vshll.u32 %v424, 16
    %v428 = vshrl.u32 %v424, 16
    %v429 = vshll.u32 %v425, 16
    %v430 = vshrl.u32 %v425, 16
    %vm431 = vc.u32 %v423, %v427
    %v432 = vsel %vm431, 1, 0
    %v433 = vadd.s32 %v423, %v427
    %v434 = vadd.s32 %v426, %v432
    %vm435 = vc.u32 %v433, %v429
    %v436 = vsel %vm435, 1, 0
    %v437 = vadd.s32 %v433, %v429
    %v438 = vadd.s32 %v434, %v436
    %v439 = vadd.s32 %v438, %v428
    %v440 = vadd.s32 %v439, %v430
    %v441 = vand.u32 %v418, 65535
    %v442 = vshrl.u32 %v418, 16
    %v443 = vand.u32 %v413, 65535
    %v444 = vshrl.u32 %v413, 16
    %v445 = vmul.u32 %v441, %v443
    %v446 = vmul.u32 %v441, %v444
    %v447 = vmul.u32 %v442, %v443
    %v448 = vmul.u32 %v442, %v444
    %v449 = vshll.u32 %v446, 16
    %v450 = vshrl.u32 %v446, 16
    %v451 = vshll.u32 %v447, 16
    %v452 = vshrl.u32 %v447, 16
    %vm453 = vc.u32 %v445, %v449
    %v454 = vsel %vm453, 1, 0
    %v455 = vadd.s32 %v445, %v449
    %v456 = vadd.s32 %v448, %v454
    %vm457 = vc.u32 %v455, %v451
    %v458 = vsel %vm457, 1, 0
    %v459 = vadd.s32 %v455, %v451
    %v460 = vadd.s32 %v456, %v458
    %v461 = vadd.s32 %v460, %v450
    %v462 = vadd.s32 %v461, %v452
    %v463 = vmul.u32 %v418, %v409
    %v464 = vadd.s32 %v440, %v459
    %vm465 = vc.u32 %v440, %v459
    %v466 = vadd.s32 %v462, 1
    %v467 = vsel %vm465, %v466, %v462
    %v468 = vadd.s32 %v463, %v467
    %v469 = vadd.s32 %v468, 536870912
    %v470 = vshrl.u32 %v469, 30
    %v471 = vshll.u32 %v470, 30
    %v472 = vsub.s32 %v468, %v471
    %vm473 = vcmp.lt.s32.totalorder %v472, 0
    %v474 = vsub.s32 0, %v472
    %v475 = vsel %vm473, %v474, %v472
    %v476 = vclz %v475
    %v477 = vsub.s32 %v476, 2
    %vm478 = vcmp.gt.s32.totalorder 0, %v477
    %v479 = vsel %vm478, 0, %v477
    %v480 = vsub.s32 32, %v479
    %v481 = vshll.u32 %v472, %v479
    %v482 = vshrl.u32 %v464, %v480
    %v483 = vor.u32 %v481, %v482
    %v484 = vsub.s32 4294967266, %v479
    %v485 = vadd.s32 %v484, 127
    %v486 = vshll.u32 %v485, 23
    %v487 = vor.u32 4788187, %v486
    %v488 = vand.u32 2147483647, %v487
    %v490 = vcvt.s32.f32 %v483
    %v491 = vmul.f32 %v490, %v488
    %v492 = vxor.u32 %v491, 2147483648
    %v493 = vsel %vm372, %v492, %v491
    %v494 = vsub.s32 4, %v470
    %v495 = vsel %vm372, %v494, %v470
    %v496 = vsel %vm371, %v58, %v493
    %v497 = vsel %vm371, 0, %v495
    %v498 = vmul.f32 %v496, %v496
    %v499 = vmul.f32 %v498, -0.001358992
    %v500 = vadd.f32 %v499, 0.041655596
    %v501 = vmul.f32 %v498, %v500
    %v502 = vadd.f32 %v501, -0.4999988
    %v503 = vmul.f32 %v498, %v502
    %v504 = vadd.f32 1.0, %v503
    %v505 = vmul.f32 %v496, %v496
    %v506 = vmul.f32 %v505, -0.00019511016
    %v507 = vadd.f32 %v506, 0.008332121
    %v508 = vmul.f32 %v505, %v507
    %v509 = vadd.f32 %v508, -0.16666654
    %v510 = vmul.f32 %v505, %v509
    %v511 = vadd.f32 %v510, 1.0
    %v512 = vmul.f32 %v511, %v496
    %vm513 = vweird.f32 %v58
    %v514 = vand.u32 %v497, 3
    %vm515 = vcmp.lt.s32.totalorder %v514, 2
    %vm516 = vcmp.eq.s32.totalorder %v514, 0
    %v517 = vxor.u32 %v512, 2147483648
    %v518 = vsel %vm516, %v504, %v517
    %vm519 = vcmp.eq.s32.totalorder %v514, 2
    %v520 = vxor.u32 %v504, 2147483648
    %v521 = vsel %vm519, %v520, %v512
    %v522 = vsel %vm515, %v518, %v521
    %v523 = vsel %vm513, nan, %v522
    %v524 = vand.u32 2147483647, %v59
    %vm525 = vcmp.le.f32.partialorder %v524, 0.7853982
    %vm526 = vcmp.lt.s32.totalorder %v59, 0
    %v527 = vand.u32 %v59, 2139095040
    %v528 = vshrl.u32 %v527, 23
    %v529 = vsub.s32 %v528, 127
    %v530 = vand.u32 2147483647, %v59
    %v531 = vand.u32 %v530, 8388607
    %v532 = vor.u32 %v531, 8388608
    %v533 = vsub.s32 0, %v532
    %v534 = vadd.s32 %v529, 1
    %vm535 = vcmp.gt.s32.totalorder %v534, 0
    %v536 = vsel %vm535, %v534, 0
    %v537 = vshrl.u32 %v536, 5
    %v538 = vand.u32 %v536, 31
    %v539 = vsub.s32 32, %v538
    %v540 = vshrl.u32 683565275, %v539
    %v541 = vshll.u32 683565275, %v538
    %v542 = vshrl.u32 2475754826, %v539
    %v543 = vor.u32 %v541, %v542
    %v544 = vshll.u32 2475754826, %v538
    %v545 = vshrl.u32 2131351028, %v539
    %v546 = vor.u32 %v544, %v545
    %v547 = vshll.u32 2131351028, %v538
    %v548 = vshrl.u32 2102212464, %v539
    %v549 = vor.u32 %v547, %v548
    %v550 = vshll.u32 2102212464, %v538
    %v551 = vshrl.u32 920167782, %v539
    %v552 = vor.u32 %v550, %v551
    %v553 = vshll.u32 920167782, %v538
    %v554 = vshrl.u32 1326507024, %v539
    %v555 = vor.u32 %v553, %v554
    %vm556 = vcmp.lt.s32.totalorder %v537, 1
    %vm557 = vcmp.lt.s32.totalorder %v537, 2
    %vm558 = vcmp.lt.s32.totalorder %v537, 3
    %vm559 = vcmp.lt.s32.totalorder %v537, 4
    %v560 = vsel %vm556, %v540, %v543
    %v561 = vsel %vm559, %v549, 2102212464
    %v562 = vsel %vm558, %v546, %v561
    %v563 = vsel %vm557, %v560, %v562
    %v564 = vsel %vm556, %v543, %v546
    %v565 = vsel %vm559, %v552, 920167782
    %v566 = vsel %vm558, %v549, %v565
    %v567 = vsel %vm557, %v564, %v566
    %v568 = vsel %vm556, %v546, %v549
    %v569 = vsel %vm559, %v555, 1326507024
    %v570 = vsel %vm558, %v552, %v569
    %v571 = vsel %vm557, %v568, %v570
    %v572 = vshll.u32 %v532, 8
    %v573 = vand.u32 %v572, 65535
    %v574 = vshrl.u32 %v572, 16
    %v575 = vand.u32 %v571, 65535
    %v576 = vshrl.u32 %v571, 16
    %v577 = vmul.u32 %v573, %v575
    %v578 = vmul.u32 %v573, %v576
    %v579 = vmul.u32 %v574, %v575
    %v580 = vmul.u32 %v574, %v576
    %v581 = vshll.u32 %v578, 16
    %v582 = vshrl.u32 %v578, 16
    %v583 = vshll.u32 %v579, 16
    %v584 = vshrl.u32 %v579, 16
    %vm585 = vc.u32 %v577, %v581
    %v586 = vsel %vm585, 1, 0
    %v587 = vadd.s32 %v577, %v581
    %v588 = vadd.s32 %v580, %v586
    %vm589 = vc.u32 %v587, %v583
    %v590 = vsel %vm589, 1, 0
    %v591 = vadd.s32 %v587, %v583
    %v592 = vadd.s32 %v588, %v590
    %v593 = vadd.s32 %v592, %v582
    %v594 = vadd.s32 %v593, %v584
    %v595 = vand.u32 %v572, 65535
    %v596 = vshrl.u32 %v572, 16
    %v597 = vand.u32 %v567, 65535
    %v598 = vshrl.u32 %v567, 16
    %v599 = vmul.u32 %v595, %v597
    %v600 = vmul.u32 %v595, %v598
    %v601 = vmul.u32 %v596, %v597
    %v602 = vmul.u32 %v596, %v598
    %v603 = vshll.u32 %v600, 16
    %v604 = vshrl.u32 %v600, 16
    %v605 = vshll.u32 %v601, 16
    %v606 = vshrl.u32 %v601, 16
    %vm607 = vc.u32 %v599, %v603
    %v608 = vsel %vm607, 1, 0
    %v609 = vadd.s32 %v599, %v603
    %v610 = vadd.s32 %v602, %v608
    %vm611 = vc.u32 %v609, %v605
    %v612 = vsel %vm611, 1, 0
    %v613 = vadd.s32 %v609, %v605
    %v614 = vadd.s32 %v610, %v612
    %v615 = vadd.s32 %v614, %v604
    %v616 = vadd.s32 %v615, %v606
    %v617 = vmul.u32 %v572, %v563
    %v618 = vadd.s32 %v594, %v613
    %vm619 = vc.u32 %v594, %v613
    %v620 = vadd.s32 %v616, 1
    %v621 = vsel %vm619, %v620, %v616
    %v622 = vadd.s32 %v617, %v621
    %v623 = vadd.s32 %v622, 536870912
    %v624 = vshrl.u32 %v623, 30
    %v625 = vshll.u32 %v624, 30
    %v626 = vsub.s32 %v622, %v625
    %vm627 = vcmp.lt.s32.totalorder %v626, 0
    %v628 = vsub.s32 0, %v626
    %v629 = vsel %vm627, %v628, %v626
    %v630 = vclz %v629
    %v631 = vsub.s32 %v630, 2
    %vm632 = vcmp.gt.s32.totalorder 0, %v631
    %v633 = vsel %vm632, 0, %v631
    %v634 = vsub.s32 32, %v633
    %v635 = vshll.u32 %v626, %v633
    %v636 = vshrl.u32 %v618, %v634
    %v637 = vor.u32 %v635, %v636
    %v638 = vsub.s32 4294967266, %v633
    %v639 = vadd.s32 %v638, 127
    %v640 = vshll.u32 %v639, 23
    %v641 = vor.u32 4788187, %v640
    %v642 = vand.u32 2147483647, %v641
    %v644 = vcvt.s32.f32 %v637
    %v645 = vmul.f32 %v644, %v642
    %v646 = vxor.u32 %v645, 2147483648
    %v647 = vsel %vm526, %v646, %v645
    %v648 = vsub.s32 4, %v624
    %v649 = vsel %vm526, %v648, %v624
    %v650 = vsel %vm525, %v59, %v647
    %v651 = vsel %vm525, 0, %v649
    %v652 = vmul.f32 %v650, %v650
    %v653 = vmul.f32 %v652, -0.001358992
    %v654 = vadd.f32 %v653, 0.041655596
    %v655 = vmul.f32 %v652, %v654
    %v656 = vadd.f32 %v655, -0.4999988
    %v657 = vmul.f32 %v652, %v656
    %v658 = vadd.f32 1.0, %v657
    %v659 = vmul.f32 %v650, %v650
    %v660 = vmul.f32 %v659, -0.00019511016
    %v661 = vadd.f32 %v660, 0.008332121
    %v662 = vmul.f32 %v659, %v661
    %v663 = vadd.f32 %v662, -0.16666654
    %v664 = vmul.f32 %v659, %v663
    %v665 = vadd.f32 %v664, 1.0
    %v666 = vmul.f32 %v665, %v650
    %vm667 = vweird.f32 %v59
    %v668 = vand.u32 %v651, 3
    %vm669 = vcmp.lt.s32.totalorder %v668, 2
    %vm670 = vcmp.eq.s32.totalorder %v668, 0
    %v671 = vxor.u32 %v666, 2147483648
    %v672 = vsel %vm670, %v658, %v671
    %vm673 = vcmp.eq.s32.totalorder %v668, 2
    %v674 = vxor.u32 %v658, 2147483648
    %v675 = vsel %vm673, %v674, %v666
    %v676 = vsel %vm669, %v672, %v675
    %v677 = vsel %vm667, nan, %v676
    %v678 = vsel %vm41, %v214, %v523
    %v679 = vsel %vm41, %v369, %v677
    %v680 = vpack.c.bf16 %v679, %v678
    %v681 = vld [vmem:[%s1] sm:$0xf]
    %v682 = vld [vmem:[%s1 + $0x4] sm:$0xf]
    %v683 = vld [vmem:[%s1 + $0x8] sm:$0xf]
    %v684 = vld [vmem:[%s1 + $0xc] sm:$0xf]
    %v685 = vld [vmem:[%s2] sm:$0x1]
    %v687 = vperm.slane %v685, 0
    %v693 = vunpack.c.l.b16 %v681
    %v694 = vunpack.c.l.b16 %v682
    %v695 = vunpack.c.l.b16 %v683
    %v696 = vunpack.c.l.b16 %v684
    %v697 = vpack.c.b16 %v694, %v693
    %v698 = vpack.c.b16 %v696, %v695
    %vm701 = vcmask 261120
    %v703 = vsel %vm701, %v680, 0
    %705 = vmatpush.bf16.msra.mxu0 0
    %706 = vmatpush.bf16.msra.mxu0 0
    %707 = vmatpush.bf16.msra.mxu0 0
    %708 = vmatpush.bf16.msra.mxu0 0
    %709 = vmatpush.bf16.msra.mxu0 0
    %710 = vmatpush.bf16.msra.mxu0 0
    %711 = vmatpush.bf16.msra.mxu0 %v698
    %712 = vmatpush.bf16.msra.mxu0 %v697
    %713 = vmatmul.bf16.gmra.mxu0 %v703
    %v714 = vpop.f32.mrf.mxu0
    %v715 = vadd.f32 %v687, %v714
    %v716 = vpop.f32.mrf.mxu0
    %v717 = vadd.f32 %v687, %v716
    %718 = vdwg.mxu0
    %v719 = vmul.f32 %v715, 0.5
    %v720 = vmul.f32 %v717, 0.5
    %v721 = vtanh.pop %v719
    %v722 = vtanh.pop %v720
    %v723 = vadd.f32 %v721, 1.0
    %v724 = vadd.f32 %v722, 1.0
    %v725 = vmul.f32 %v723, 0.5
    %v726 = vmul.f32 %v724, 0.5
    %v727 = vmul.f32 %v715, %v725
    %v728 = vmul.f32 %v717, %v726
    %v729 = vpack.c.bf16 %v728, %v727
    %v730 = vld [vmem:[#allocation2] sm:$0xf]
    %v731 = vld [vmem:[#allocation2 + $0x4] sm:$0xf]
    %v732 = vld [vmem:[#allocation2 + $0x8] sm:$0xf]
    %v733 = vld [vmem:[#allocation2 + $0xc] sm:$0xf]
    %v734 = vld [vmem:[#allocation2 + $0x10] sm:$0xf]
    %v735 = vld [vmem:[#allocation2 + $0x14] sm:$0xf]
    %v736 = vld [vmem:[#allocation2 + $0x18] sm:$0xf]
    %v737 = vld [vmem:[#allocation2 + $0x1c] sm:$0xf]
    %v738 = vld [vmem:[#allocation2 + $0x20] sm:$0xf]
    %v739 = vld [vmem:[#allocation2 + $0x24] sm:$0xf]
    %v740 = vld [vmem:[#allocation2 + $0x28] sm:$0xf]
    %v741 = vld [vmem:[#allocation2 + $0x2c] sm:$0xf]
    %v742 = vld [vmem:[#allocation2 + $0x30] sm:$0xf]
    %v743 = vld [vmem:[#allocation2 + $0x34] sm:$0xf]
    %v744 = vld [vmem:[#allocation2 + $0x38] sm:$0xf]
    %v745 = vld [vmem:[#allocation2 + $0x3c] sm:$0xf]
    %v746 = vld [vmem:[%s4] sm:$0x1]
    %v748 = vperm.slane %v746, 0
    %v766 = vunpack.c.l.b16 %v730
    %v767 = vunpack.c.l.b16 %v731
    %v768 = vunpack.c.l.b16 %v732
    %v769 = vunpack.c.l.b16 %v733
    %v770 = vunpack.c.l.b16 %v734
    %v771 = vunpack.c.l.b16 %v735
    %v772 = vunpack.c.l.b16 %v736
    %v773 = vunpack.c.l.b16 %v737
    %v774 = vunpack.c.l.b16 %v738
    %v775 = vunpack.c.l.b16 %v739
    %v776 = vunpack.c.l.b16 %v740
    %v777 = vunpack.c.l.b16 %v741
    %v778 = vunpack.c.l.b16 %v742
    %v779 = vunpack.c.l.b16 %v743
    %v780 = vunpack.c.l.b16 %v744
    %v781 = vunpack.c.l.b16 %v745
    %v782 = vpack.c.b16 %v767, %v766
    %v783 = vpack.c.b16 %v769, %v768
    %v784 = vpack.c.b16 %v771, %v770
    %v785 = vpack.c.b16 %v773, %v772
    %v786 = vpack.c.b16 %v775, %v774
    %v787 = vpack.c.b16 %v777, %v776
    %v788 = vpack.c.b16 %v779, %v778
    %v789 = vpack.c.b16 %v781, %v780
    %798 = vmatpush.bf16.msra.mxu0 %v789
    %799 = vmatpush.bf16.msra.mxu0 %v788
    %800 = vmatpush.bf16.msra.mxu0 %v787
    %801 = vmatpush.bf16.msra.mxu0 %v786
    %802 = vmatpush.bf16.msra.mxu0 %v785
    %803 = vmatpush.bf16.msra.mxu0 %v784
    %804 = vmatpush.bf16.msra.mxu0 %v783
    %805 = vmatpush.bf16.msra.mxu0 %v782
    %806 = vmatmul.bf16.gmra.mxu0 %v729
    %v807 = vpop.f32.mrf.mxu0
    %v808 = vadd.f32 %v748, %v807
    %v809 = vpop.f32.mrf.mxu0
    %v810 = vadd.f32 %v748, %v809
    %811 = vdwg.mxu0
    %v812 = vmul.f32 %v808, 0.5
    %v813 = vmul.f32 %v810, 0.5
    %v814 = vtanh.pop %v812
    %v815 = vtanh.pop %v813
    %v816 = vadd.f32 %v814, 1.0
    %v817 = vadd.f32 %v815, 1.0
    %v818 = vmul.f32 %v816, 0.5
    %v819 = vmul.f32 %v817, 0.5
    %v820 = vmul.f32 %v808, %v818
    %v821 = vmul.f32 %v810, %v819
    %822 = vst [vmem:[%s5] sm:$0xff] %v820
    %823 = vst [vmem:[%s5 + $0x8] sm:$0xff] %v821
    // Predicated region
    $region26: #{time_embedding.1} parent=1 // pred_check
      _
    $region27: #{time_embedding.1} parent=1 // pred_check_branch
      %825 = sbr.rel (0) target = $region29
    $region28: #{time_embedding.1} parent=1 // pred_region
      _
    $region29: #{time_embedding.1} parent=1 // pred_fallthru
      _
    // Predicated region
    $region30: #{time_embedding.1} parent=1 // pred_check
      _
    $region31: #{time_embedding.1} parent=1 // pred_check_branch
      %827 = sbr.rel (0) target = $region33
    $region32: #{time_embedding.1} parent=1 // pred_region
      _
    $region33: #{time_embedding.1} parent=1 // pred_fallthru
      _
    %828 = vsyncpa [#allocation3], 1

</llo_original>
